<compile_context>
chip_gen: v7x
topology: tpu7x:2x2x1
jax: 0.10.0
libtpu: 0.0.40
codegen_flags: <defaults>
</compile_context>

<pallas_src>
import jax
import jax.numpy as jnp
from jax.experimental import pallas as pl
from jax.experimental.pallas import tpu as pltpu


def _round_up(x, m):
    return (x + m - 1) // m * m


def _sublane_quantum(itemsize):
    # VMEM tiling is (8 * packing, 128): 8 rows for 4-byte, 16 for 2-byte, ...
    return max(8, 32 // itemsize)


def _vmem_capacity_bytes(default=64 << 20):
    try:
        return int(pltpu.get_tpu_info().vmem_capacity_bytes)
    except Exception:
        # Unknown generation — assume the smallest (v7x, 64 MiB per core).
        return default


def _pick_tile_co(c):
    """C_out tile.  Only divisors of C are allowed so the in-kernel residual
    slice x[co*tile_co:(co+1)*tile_co] can never run out of bounds."""
    if c <= 512:
        return c
    for cand in (512, 256, 128, 64, 32, 16, 8):
        if c % cand == 0:
            return cand
    # TODO(synk): very large C with no nice divisor falls back to untiled C_out.
    return c


def _make_kernel(tile_n, tile_co, c_in):
    split_co = tile_co != c_in

    def kernel(x_ref, w_ref, b_ref, o_ref):
        # x_ref: (tile_n, C_in, tile_s)   lanes = spatial (lane-dense)
        # w_ref: (tile_co, C_in)          grid-invariant along n / s axes
        # b_ref: (tile_co, 1)
        # o_ref: (tile_n, tile_co, tile_s)
        w = w_ref[...].astype(jnp.float32)
        b = b_ref[...].astype(jnp.float32)
        if split_co:
            co_start = pl.multiple_of(pl.program_id(1) * tile_co, tile_co)
        for bi in range(tile_n):
            x = x_ref[bi]                                    # (C_in, tile_s)
            y = jnp.dot(w, x.astype(jnp.float32),            # MXU channel mix
                        preferred_element_type=jnp.float32)
            if split_co:
                res = x_ref[bi, pl.ds(co_start, tile_co), :]
            else:
                res = x
            o_ref[bi] = (y + b + res.astype(jnp.float32)).astype(o_ref.dtype)

    return kernel


def residual_conv1x1(x_nchw, weight, bias):
    """Residual(Conv2d(C, C, kernel_size=1))(x) for NCHW input: W@x + b + x."""
    n, c, h, w_dim = x_nchw.shape
    s = h * w_dim
    dt = x_nchw.dtype
    itemsize = jnp.dtype(dt).itemsize
    sub = _sublane_quantum(itemsize)

    x_ncs = x_nchw.reshape(n, c, s)              # free reshape (trailing dims)
    w_mat = weight.reshape(c, c)                 # keep native weight dtype
    b_col = bias.reshape(c, 1)
    w_itemsize = jnp.dtype(w_mat.dtype).itemsize

    # ---- VMEM budget (sublane padding + double buffers + f32 temps) --------
    cap = _vmem_capacity_bytes()
    vmem_limit = max(min(cap * 3 // 4, 64 << 20), 32 << 20)
    tile_co = _pick_tile_co(c)
    pad_c = _round_up(c, sub)
    pad_co = _round_up(tile_co, sub)
    w_sub = _sublane_quantum(w_itemsize)
    w_foot = 2 * _round_up(tile_co, w_sub) * _round_up(c, 128) * w_itemsize
    b_foot = 2 * _round_up(tile_co, w_sub) * 128 * 4
    budget = max(vmem_limit - w_foot - b_foot - (4 << 20), 1 << 20)

    # Bytes per unit of (tile_n * tile_s): streamed x + out, double-buffered.
    col_stream = (2 * pad_c + 2 * pad_co) * itemsize
    # f32 intermediates (matmul acc, adds, cast) — counted once, not per tile_n.
    col_temp = 3 * pad_co * 4 + (pad_c * 4 if itemsize != 4 else 0)

    max_tile_n = 8                               # in-kernel loop is unrolled
    if s * (col_stream + col_temp) <= budget:
        # Whole-S blocks; stack batch rows to amortize per-step overhead.
        tile_s = s
        tile_n = max(1, min(n, max_tile_n,
                            (budget - s * col_temp) // (s * col_stream)))
    else:
        tile_n = 1
        tile_s = max(128, (budget // (col_stream + col_temp)) // 128 * 128)

    grid = (pl.cdiv(n, tile_n), pl.cdiv(c, tile_co), pl.cdiv(s, tile_s))

    # v7x megacore: make sure there are >= 2 blocks when the tensor is big
    # enough to be worth splitting across the two TensorCores.
    if grid[0] * grid[1] * grid[2] == 1 and n * c * s * itemsize > (1 << 20):
        if tile_n >= 2:
            tile_n = pl.cdiv(tile_n, 2)
        elif s > 128:
            tile_s = max(128, _round_up(pl.cdiv(s, 2), 128))
        grid = (pl.cdiv(n, tile_n), pl.cdiv(c, tile_co), pl.cdiv(s, tile_s))

    co_blocks = grid[1]
    flops = 2 * n * s * c * c + 3 * n * s * c
    bytes_accessed = ((co_blocks + 1) * n * c * s * itemsize
                      + c * c * w_itemsize + c * w_itemsize)

    out = pl.pallas_call(
        _make_kernel(tile_n, tile_co, c),
        out_shape=jax.ShapeDtypeStruct((n, c, s), dt),
        grid_spec=pltpu.PrefetchScalarGridSpec(
            num_scalar_prefetch=0,
            grid=grid,
            in_specs=[
                pl.BlockSpec((tile_n, c, tile_s), lambda ni, ci, si: (ni, 0, si)),
                # W / b are grid-invariant along n / s -> fetched once per co.
                pl.BlockSpec((tile_co, c), lambda ni, ci, si: (ci, 0)),
                pl.BlockSpec((tile_co, 1), lambda ni, ci, si: (ci, 0)),
            ],
            out_specs=pl.BlockSpec((tile_n, tile_co, tile_s),
                                   lambda ni, ci, si: (ni, ci, si)),
        ),
        compiler_params=pltpu.CompilerParams(
            dimension_semantics=("parallel", "parallel", "parallel"),
            vmem_limit_bytes=int(vmem_limit)),
        cost_estimate=pl.CostEstimate(flops=int(flops), transcendentals=0,
                                      bytes_accessed=int(bytes_accessed)),
    )(x_ncs, w_mat, b_col)

    return out.reshape(n, c, h, w_dim)


if __name__ == "__main__":
    key = jax.random.PRNGKey(0)
    kx, kw, kb = jax.random.split(key, 3)

    # Primary test: Residual(Conv2d(4, 4, 1)) on a small NCHW batch.
    N, C, H, W = 2, 4, 16, 16
    x = jax.random.normal(kx, (N, C, H, W), dtype=jnp.float32)
    weight = jax.random.normal(kw, (C, C, 1, 1), dtype=jnp.float32) * 0.1
    bias = jax.random.normal(kb, (C,), dtype=jnp.float32) * 0.1

    out = jax.block_until_ready(residual_conv1x1(x, weight, bias))
    ref = (jnp.einsum("nchw,oc->nohw", x, weight.reshape(C, C))
           + bias.reshape(1, C, 1, 1) + x)
    assert out.shape == x.shape and out.dtype == x.dtype
    assert jnp.allclose(out, ref, atol=1e-5, rtol=1e-5)

    # Second shape: N=1, non-128 spatial extent (full-extent block path).
    N2, C2, H2, W2 = 1, 8, 12, 12
    x2 = jax.random.normal(kx, (N2, C2, H2, W2), dtype=jnp.float32)
    w2 = jax.random.normal(kw, (C2, C2, 1, 1), dtype=jnp.float32) * 0.1
    b2 = jax.random.normal(kb, (C2,), dtype=jnp.float32) * 0.1
    out2 = jax.block_until_ready(residual_conv1x1(x2, w2, b2))
    ref2 = (jnp.einsum("nchw,oc->nohw", x2, w2.reshape(C2, C2))
            + b2.reshape(1, C2, 1, 1) + x2)
    assert jnp.allclose(out2, ref2, atol=1e-5, rtol=1e-5)

    print("KERNEL_OK")
</pallas_src>

<mosaic_0001>
module attributes {stable_mosaic.version = 11 : i64} {
  func.func @kernel(%arg0: i32, %arg1: i32, %arg2: i32, %arg3: memref<2x4x256xf32, #tpu.memory_space<vmem>>, %arg4: memref<4x4xf32, #tpu.memory_space<vmem>>, %arg5: memref<4x1xf32, #tpu.memory_space<vmem>>, %arg6: memref<2x4x256xf32, #tpu.memory_space<vmem>>) attributes {dimension_semantics = [#tpu.dimension_semantics<parallel>, #tpu.dimension_semantics<parallel>, #tpu.dimension_semantics<parallel>], iteration_bounds = array<i64: 1, 1, 1>, scalar_prefetch = 0 : i64, scratch_operands = 0 : i64, tpu.core_type = #tpu.core_type<tc>, window_params = [{transform_indices = @transform_0, window_bounds = array<i64: 2, 4, 256>}, {transform_indices = @transform_1, window_bounds = array<i64: 4, 4>}, {transform_indices = @transform_2, window_bounds = array<i64: 4, 1>}, {transform_indices = @transform_3, window_bounds = array<i64: 2, 4, 256>}]} {
    %c0 = arith.constant 0 : index
    %c0_0 = arith.constant 0 : index
    %0 = vector.load %arg4[%c0, %c0_0] : memref<4x4xf32, #tpu.memory_space<vmem>>, vector<4x4xf32>
    %c0_1 = arith.constant 0 : index
    %c0_2 = arith.constant 0 : index
    %1 = vector.load %arg5[%c0_1, %c0_2] : memref<4x1xf32, #tpu.memory_space<vmem>>, vector<4x1xf32>
    %c0_3 = arith.constant 0 : index
    %c0_4 = arith.constant 0 : index
    %c0_5 = arith.constant 0 : index
    %2 = vector.load %arg3[%c0_3, %c0_4, %c0_5] : memref<2x4x256xf32, #tpu.memory_space<vmem>>, vector<1x4x256xf32>
    %3 = vector.shape_cast %2 : vector<1x4x256xf32> to vector<4x256xf32>
    %cst = arith.constant dense<0.000000e+00> : vector<4x256xf32>
    %4 = tpu.matmul %0, %3, %cst {dimension_numbers = #tpu.dot_dimension_numbers<[1], [0], [0], [1], [0, 0, 1, 1], [], []>} : vector<4x4xf32>, vector<4x256xf32>, vector<4x256xf32> -> vector<4x256xf32>
    %5 = vector.broadcast %1 : vector<4x1xf32> to vector<4x256xf32>
    %6 = arith.addf %4, %5 : vector<4x256xf32>
    %7 = arith.addf %6, %3 : vector<4x256xf32>
    %c0_6 = arith.constant 0 : index
    %c0_7 = arith.constant 0 : index
    %c0_8 = arith.constant 0 : index
    %8 = vector.load %arg6[%c0_6, %c0_7, %c0_8] : memref<2x4x256xf32, #tpu.memory_space<vmem>>, vector<1x4x256xf32>
    %9 = vector.shape_cast %8 : vector<1x4x256xf32> to vector<4x256xf32>
    %10 = vector.shape_cast %7 : vector<4x256xf32> to vector<1x4x256xf32>
    tpu.vector_store %arg6[%c0_6, %c0_7, %c0_8], %10 {strides = array<i32>} : memref<2x4x256xf32, #tpu.memory_space<vmem>>, vector<1x4x256xf32>,
    %c1 = arith.constant 1 : index
    %c0_9 = arith.constant 0 : index
    %c0_10 = arith.constant 0 : index
    %11 = vector.load %arg3[%c1, %c0_9, %c0_10] : memref<2x4x256xf32, #tpu.memory_space<vmem>>, vector<1x4x256xf32>
    %12 = vector.shape_cast %11 : vector<1x4x256xf32> to vector<4x256xf32>
    %cst_11 = arith.constant dense<0.000000e+00> : vector<4x256xf32>
    %13 = tpu.matmul %0, %12, %cst_11 {dimension_numbers = #tpu.dot_dimension_numbers<[1], [0], [0], [1], [0, 0, 1, 1], [], []>} : vector<4x4xf32>, vector<4x256xf32>, vector<4x256xf32> -> vector<4x256xf32>
    %14 = vector.broadcast %1 : vector<4x1xf32> to vector<4x256xf32>
    %15 = arith.addf %13, %14 : vector<4x256xf32>
    %16 = arith.addf %15, %12 : vector<4x256xf32>
    %c1_12 = arith.constant 1 : index
    %c0_13 = arith.constant 0 : index
    %c0_14 = arith.constant 0 : index
    %17 = vector.load %arg6[%c1_12, %c0_13, %c0_14] : memref<2x4x256xf32, #tpu.memory_space<vmem>>, vector<1x4x256xf32>
    %18 = vector.shape_cast %17 : vector<1x4x256xf32> to vector<4x256xf32>
    %19 = vector.shape_cast %16 : vector<4x256xf32> to vector<1x4x256xf32>
    tpu.vector_store %arg6[%c1_12, %c0_13, %c0_14], %19 {strides = array<i32>} : memref<2x4x256xf32, #tpu.memory_space<vmem>>, vector<1x4x256xf32>,
    return
  }
  func.func @transform_0(%arg0: i32, %arg1: i32, %arg2: i32) -> (i32, i32, i32) {
    %c0_i32 = arith.constant 0 : i32
    %c0_i32_0 = arith.constant 0 : i32
    return %arg0, %c0_i32, %arg2 : i32, i32, i32
  }
  func.func @transform_1(%arg0: i32, %arg1: i32, %arg2: i32) -> (i32, i32) {
    %c0_i32 = arith.constant 0 : i32
    %c0_i32_0 = arith.constant 0 : i32
    return %arg1, %c0_i32 : i32, i32
  }
  func.func @transform_2(%arg0: i32, %arg1: i32, %arg2: i32) -> (i32, i32) {
    %c0_i32 = arith.constant 0 : i32
    %c0_i32_0 = arith.constant 0 : i32
    return %arg1, %c0_i32 : i32, i32
  }
  func.func @transform_3(%arg0: i32, %arg1: i32, %arg2: i32) -> (i32, i32, i32) {
    %c0_i32 = arith.constant 0 : i32
    return %arg0, %arg1, %arg2 : i32, i32, i32
  }
}

</mosaic_0001>

<llo_original>
// kernel: tpu_custom_call.1
$region0: #{tpu_custom_call.1}
  #allocation0 [shape = 'u32[]', space=smem, size = 0x4, offset = 0x4, fixed_abs, tag = 'smem constant byte address 0x4 - core index']
  #allocation1 [shape = 'u32[144,128]{1,0:T(1,128)}', space=vmem, size = 0x12000, scoped, tag = 'internal scratch']
  %s0 = inlined_call_operand.hbm [shape: f32[2,4,256], index: 0, kind: input, shape index: {}]
  %s1 = inlined_call_operand.vmem [shape: f32[4,4], index: 1, kind: input, shape index: {}]
  %s2 = inlined_call_operand.vmem [shape: f32[4,1], index: 2, kind: input, shape index: {}]
  %s3 = inlined_call_operand.hbm [shape: f32[2,4,256], index: 3, kind: output, shape index: {}]
  %s4 = sld [smem:[#allocation0]]
  $region26: #{tpu_custom_call.1} parent=0
    _
  %s6 = ssub.s32 1, %s4
  %s7 = scalar_select 0, %s6, %s4
  $region1: #{tpu_custom_call.1} parent=0
    #allocation2 [shape = 'u8[8192]{0}', space=vmem, size = 0x2000, scoped, tag = 'input window, operand 0, single buffered']
    #allocation3 [shape = 's32[1]{0}', space=sflag, size = 0x4, scoped, tag = 'scoped memory for tpu_custom_call.1']
    #allocation4 [shape = 's32[1]{0}', space=sflag, size = 0x4, scoped, tag = 'scoped memory for tpu_custom_call.1']
    #allocation5 [shape = 'u8[8192]{0}', space=vmem, size = 0x2000, scoped, tag = 'output window, operand 0, single buffered']
    %8 = vsyncpa [#allocation3], 0
    %9 = vsyncpa [#allocation4], 0
    // Predicated region
    $region2: #{tpu_custom_call.1} parent=1 // pred_check
      _
    $region3: #{tpu_custom_call.1} parent=1 // pred_check_branch
      %11 = sbr.rel (0) target = $region5
    $region4: #{tpu_custom_call.1} parent=1 // pred_region
      %s13 = ssub.s32 256, 256
      %14 = vsyncadd [#allocation3], %s13
      %s15 = sshll.u32 [#allocation2], 4
      %s16 = int_to_ptr.vmem [resolvable:$true] %s15
      %21 = dma.hbm_to_vmem [thread:$0]  %s0, 256, %s16, [#allocation3], 128, 128, 8
    $region5: #{tpu_custom_call.1} parent=1 // pred_fallthru
      _
    // Predicated region
    $region6: #{tpu_custom_call.1} parent=1 // pred_check
      _
    $region7: #{tpu_custom_call.1} parent=1 // pred_check_branch
      %23 = sbr.rel (0) target = $region9
    $region8: #{tpu_custom_call.1} parent=1 // pred_region
      _
    $region9: #{tpu_custom_call.1} parent=1 // pred_fallthru
      _
    // Predicated region
    $region10: #{tpu_custom_call.1} parent=1 // pred_check
      _
    $region11: #{tpu_custom_call.1} parent=1 // pred_check_branch
      %25 = sbr.rel (0) target = $region13
    $region12: #{tpu_custom_call.1} parent=1 // pred_region
      _
    $region13: #{tpu_custom_call.1} parent=1 // pred_fallthru
      _
    // Predicated region
    $region14: #{tpu_custom_call.1} parent=1 // pred_check
      _
    $region15: #{tpu_custom_call.1} parent=1 // pred_check_branch
      %27 = sbr.rel (0) target = $region17
    $region16: #{tpu_custom_call.1} parent=1 // pred_region
      %28 = dma.done [#allocation3], 256
    $region17: #{tpu_custom_call.1} parent=1 // pred_fallthru
      _
    %v29 = vld [vmem:[%s1] sm:$0xf]
    %v30 = vld [vmem:[%s2] sm:$0xf]
    %v31 = vld [vmem:[#allocation2] sm:$0xff]
    %33 = vset.pattern.permute.xlu0 0
    %34 = vperm.xlu0 %33, %v30
    %v35 = vpop.permute.xlu0 %34
    %v38 = vcombine.high %v31, %v31
    %vm39 = vcmask 31744
    %v41 = vsel %vm39, %v29, 0
    %vm43 = vcmask 1043456
    %v44 = vsel %vm43, %v31, 0
    %v46 = vsel %vm43, %v38, 0
    %48 = vmatprep.subr.mxu0 %v46
    %49 = vmatpush1.msra.mxu0 %v44
    %50 = vmatprep.subr.mxu0 0.0
    %51 = vmatpush1.msra.mxu0 0.0
    %52 = vmatprep.subr.mxu0 0.0
    %53 = vmatpush1.msra.mxu0 0.0
    %54 = vmatprep.subr.mxu0 0.0
    %55 = vmatpush1.msra.mxu0 0.0
    %56 = vmatprep.subr.mxu0 0.0
    %57 = vmatpush1.msra.mxu0 0.0
    %58 = vmatprep.subr.mxu0 0.0
    %59 = vmatpush1.msra.mxu0 0.0
    %60 = vmatprep.subr.mxu0 0.0
    %61 = vmatpush1.msra.mxu0 0.0
    %62 = vmatprep.subr.mxu0 0.0
    %63 = vmatpush1.msra.mxu0 0.0
    %64 = vmatprep.subr.mxu0 0.0
    %65 = vmatpush1.msra.mxu0 0.0
    %66 = vmatprep.subr.mxu0 0.0
    %67 = vmatpush1.msra.mxu0 0.0
    %68 = vmatprep.subr.mxu0 0.0
    %69 = vmatpush1.msra.mxu0 0.0
    %70 = vmatprep.subr.mxu0 0.0
    %71 = vmatpush1.msra.mxu0 0.0
    %72 = vmatprep.subr.mxu0 0.0
    %73 = vmatpush1.msra.mxu0 0.0
    %74 = vmatprep.subr.mxu0 0.0
    %75 = vmatpush1.msra.mxu0 0.0
    %76 = vmatprep.subr.mxu0 0.0
    %77 = vmatpush1.msra.mxu0 0.0
    %78 = vmatprep.subr.mxu0 0.0
    %79 = vmatpush1.msra.mxu0 0.0
    %80 = vmatprep.subr.mxu0 0.0
    %81 = vmatpush1.msra.mxu0 0.0
    %82 = vmatprep.subr.mxu0 0.0
    %83 = vmatpush1.msra.mxu0 0.0
    %84 = vmatprep.subr.mxu0 0.0
    %85 = vmatpush1.msra.mxu0 0.0
    %86 = vmatprep.subr.mxu0 0.0
    %87 = vmatpush1.msra.mxu0 0.0
    %88 = vmatprep.subr.mxu0 0.0
    %89 = vmatpush1.msra.mxu0 0.0
    %90 = vmatprep.subr.mxu0 0.0
    %91 = vmatpush1.msra.mxu0 0.0
    %92 = vmatprep.subr.mxu0 0.0
    %93 = vmatpush1.msra.mxu0 0.0
    %94 = vmatprep.subr.mxu0 0.0
    %95 = vmatpush1.msra.mxu0 0.0
    %96 = vmatprep.subr.mxu0 0.0
    %97 = vmatpush1.msra.mxu0 0.0
    %98 = vmatprep.subr.mxu0 0.0
    %99 = vmatpush1.msra.mxu0 0.0
    %100 = vmatprep.subr.mxu0 0.0
    %101 = vmatpush1.msra.mxu0 0.0
    %102 = vmatprep.subr.mxu0 0.0
    %103 = vmatpush1.msra.mxu0 0.0
    %104 = vmatprep.subr.mxu0 0.0
    %105 = vmatpush1.msra.mxu0 0.0
    %106 = vmatprep.subr.mxu0 0.0
    %107 = vmatpush1.msra.mxu0 0.0
    %108 = vmatprep.subr.mxu0 0.0
    %109 = vmatpush1.msra.mxu0 0.0
    %110 = vmatprep.subr.mxu0 0.0
    %111 = vmatpush1.msra.mxu0 0.0
    %112 = vmatprep.mubr.f32.mxu0 0.0
    %113 = vmatmul.mubr.f32.gmra.mrb[0].mxu0 %v41
    %v114 = vpop.f32.mrb[0].mxu0
    %v115 = vadd.f32 %v35, %v114
    %v116 = vpop.f32.mrb[0].mxu0
    %v117 = vadd.f32 %v35, %v116
    %118 = vdwg.mxu0
    %v120 = vadd.f32 %v115, %v31
    %v121 = vadd.f32 %v117, %v38
    %v124 = vcombine.low %v120, %v121
    %126 = vst [vmem:[#allocation5] sm:$0xff] %v124
    %s127 = scalar_lea.vmem [#allocation2], 8
    %v128 = vld [vmem:[%s127] sm:$0xff]
    %v130 = vcombine.high %v128, %v128
    %v131 = vsel %vm43, %v128, 0
    %v133 = vsel %vm43, %v130, 0
    %135 = vmatprep.subr.mxu0 %v133
    %136 = vmatpush1.msra.mxu0 %v131
    %137 = vmatprep.subr.mxu0 0.0
    %138 = vmatpush1.msra.mxu0 0.0
    %139 = vmatprep.subr.mxu0 0.0
    %140 = vmatpush1.msra.mxu0 0.0
    %141 = vmatprep.subr.mxu0 0.0
    %142 = vmatpush1.msra.mxu0 0.0
    %143 = vmatprep.subr.mxu0 0.0
    %144 = vmatpush1.msra.mxu0 0.0
    %145 = vmatprep.subr.mxu0 0.0
    %146 = vmatpush1.msra.mxu0 0.0
    %147 = vmatprep.subr.mxu0 0.0
    %148 = vmatpush1.msra.mxu0 0.0
    %149 = vmatprep.subr.mxu0 0.0
    %150 = vmatpush1.msra.mxu0 0.0
    %151 = vmatprep.subr.mxu0 0.0
    %152 = vmatpush1.msra.mxu0 0.0
    %153 = vmatprep.subr.mxu0 0.0
    %154 = vmatpush1.msra.mxu0 0.0
    %155 = vmatprep.subr.mxu0 0.0
    %156 = vmatpush1.msra.mxu0 0.0
    %157 = vmatprep.subr.mxu0 0.0
    %158 = vmatpush1.msra.mxu0 0.0
    %159 = vmatprep.subr.mxu0 0.0
    %160 = vmatpush1.msra.mxu0 0.0
    %161 = vmatprep.subr.mxu0 0.0
    %162 = vmatpush1.msra.mxu0 0.0
    %163 = vmatprep.subr.mxu0 0.0
    %164 = vmatpush1.msra.mxu0 0.0
    %165 = vmatprep.subr.mxu0 0.0
    %166 = vmatpush1.msra.mxu0 0.0
    %167 = vmatprep.subr.mxu0 0.0
    %168 = vmatpush1.msra.mxu0 0.0
    %169 = vmatprep.subr.mxu0 0.0
    %170 = vmatpush1.msra.mxu0 0.0
    %171 = vmatprep.subr.mxu0 0.0
    %172 = vmatpush1.msra.mxu0 0.0
    %173 = vmatprep.subr.mxu0 0.0
    %174 = vmatpush1.msra.mxu0 0.0
    %175 = vmatprep.subr.mxu0 0.0
    %176 = vmatpush1.msra.mxu0 0.0
    %177 = vmatprep.subr.mxu0 0.0
    %178 = vmatpush1.msra.mxu0 0.0
    %179 = vmatprep.subr.mxu0 0.0
    %180 = vmatpush1.msra.mxu0 0.0
    %181 = vmatprep.subr.mxu0 0.0
    %182 = vmatpush1.msra.mxu0 0.0
    %183 = vmatprep.subr.mxu0 0.0
    %184 = vmatpush1.msra.mxu0 0.0
    %185 = vmatprep.subr.mxu0 0.0
    %186 = vmatpush1.msra.mxu0 0.0
    %187 = vmatprep.subr.mxu0 0.0
    %188 = vmatpush1.msra.mxu0 0.0
    %189 = vmatprep.subr.mxu0 0.0
    %190 = vmatpush1.msra.mxu0 0.0
    %191 = vmatprep.subr.mxu0 0.0
    %192 = vmatpush1.msra.mxu0 0.0
    %193 = vmatprep.subr.mxu0 0.0
    %194 = vmatpush1.msra.mxu0 0.0
    %195 = vmatprep.subr.mxu0 0.0
    %196 = vmatpush1.msra.mxu0 0.0
    %197 = vmatprep.subr.mxu0 0.0
    %198 = vmatpush1.msra.mxu0 0.0
    %199 = vmatprep.mubr.f32.mxu0 0.0
    %200 = vmatmul.mubr.f32.gmra.mrb[0].mxu0 %v41
    %v201 = vpop.f32.mrb[0].mxu0
    %v202 = vadd.f32 %v35, %v201
    %v203 = vpop.f32.mrb[0].mxu0
    %v204 = vadd.f32 %v35, %v203
    %205 = vdwg.mxu0
    %v207 = vadd.f32 %v202, %v128
    %v208 = vadd.f32 %v204, %v130
    %v211 = vcombine.low %v207, %v208
    %s213 = scalar_lea.vmem [#allocation5], 8
    %214 = vst [vmem:[%s213] sm:$0xff] %v211
    // Predicated region
    $region18: #{tpu_custom_call.1} parent=1 // pred_check
      _
    $region19: #{tpu_custom_call.1} parent=1 // pred_check_branch
      %216 = sbr.rel (0) target = $region21
    $region20: #{tpu_custom_call.1} parent=1 // pred_region
      %s218 = ssub.s32 256, 256
      %219 = vsyncadd [#allocation4], %s218
      %s220 = sshll.u32 [#allocation5], 4
      %s221 = int_to_ptr.vmem [resolvable:$true] %s220
      %226 = dma.vmem_to_hbm [thread:$0]  %s221, 256, %s3, [#allocation4], 128, 128, 8
    $region21: #{tpu_custom_call.1} parent=1 // pred_fallthru
      _
    // Predicated region
    $region22: #{tpu_custom_call.1} parent=1 // pred_check
      _
    $region23: #{tpu_custom_call.1} parent=1 // pred_check_branch
      %228 = sbr.rel (0) target = $region25
    $region24: #{tpu_custom_call.1} parent=1 // pred_region
      %229 = dma.done [#allocation4], 256
    $region25: #{tpu_custom_call.1} parent=1 // pred_fallthru
      _
    %230 = vsyncpa [#allocation3], 1
    %231 = vsyncpa [#allocation4], 1

</llo_original>
